<compile_context>
chip_gen: v5e
topology: v5e:2x2
jax: 0.10.0
libtpu: 0.0.40
codegen_flags: <defaults>
</compile_context>

<pallas_src>
import jax
import jax.numpy as jnp
import numpy as np
from jax.experimental import pallas as pl
from jax.experimental.pallas import tpu as pltpu

ROI_SIZE = 7          # fixed by the module (self.roi_size = 7)
GROUP = 8             # rows per y/x sample index, padded 7 -> 8 (sublane aligned)
S_PAD = 2 * GROUP     # 16 sample rows per ROI (rows 7 and 15 are zero pad)
NL = 128              # output lanes (x-sample columns padded 16 -> 128)


def _round_up(x, m):
    return (x + m - 1) // m * m


def _largest_divisor_leq(n, cap):
    d = min(n, cap)
    while n % d:
        d -= 1
    return d


def _bilinear_weights(base, stride, size):
    """Separable clamped-bilinear sampling weights, shape (R, 16, size).

    Row (t*8 + m), m in 0..6, holds the weights of sample coordinate
        base + stride*m + stride*(t+1)/3          (t in {0, 1})
    over the `size` source pixels; rows 7 and 15 are zero padding.  Reproduces
    the module's clamp-before-distance bilinear formula exactly (the weight
    collapses to 0 when both clamped indices coincide).
    """
    m = jnp.arange(ROI_SIZE, dtype=jnp.float32)                       # (7,)
    frac = jnp.array([1.0 / 3.0, 2.0 / 3.0], dtype=jnp.float32)       # (2,)
    coord = (base[:, None, None]
             + stride[:, None, None] * (frac[None, :, None] + m[None, None, :]))
    lo = jnp.floor(coord)                                             # (R, 2, 7)
    c1 = jnp.clip(lo, 0.0, float(size - 1))
    c2 = jnp.clip(lo + 1.0, 0.0, float(size - 1))
    cols = jnp.arange(size, dtype=jnp.float32)[None, None, None, :]
    w = (jnp.where(cols == c1[..., None], (c2 - coord)[..., None], 0.0)
         + jnp.where(cols == c2[..., None], (coord - c1)[..., None], 0.0))
    w = jnp.pad(w, ((0, 0), (0, 0), (0, GROUP - ROI_SIZE), (0, 0)))   # (R, 2, 8, size)
    return w.reshape(base.shape[0], S_PAD, size)                      # (R, 16, size)


def _roi_align_kernel(wy_ref, wxt_ref, feat_ref, out_ref):
    # wy_ref  : (TR*16, H)    bf16  row   = roi*16 + t_y*8 + m   (rows t*8+7 zero)
    # wxt_ref : (TR, WL, 128) f32   [roi, w, t_x*8 + n]          (cols 7, 15.. zero)
    # feat_ref: (H, TC*WL)    bf16  column = c*WL + w            (w >= W zero)
    # out_ref : (TR, 7, 128)  f32   lane t_x*8 + n; reduced over y-samples and all
    #                               channel blocks seen so far for this ROI block.
    cb = pl.program_id(1)
    TR, WL, _ = wxt_ref.shape
    TC = feat_ref.shape[1] // WL

    # (1) H-contraction for every ROI sample-row and channel of the block:
    #     ONE MXU matmul, bf16 operands, f32 accumulation.
    t = jnp.dot(wy_ref[...], feat_ref[...],
                preferred_element_type=jnp.float32)            # (TR*16, TC*WL) f32

    # (2) W-contraction with the channel loop fused into the matmul M dim:
    #     pack the lane-tile-aligned per-channel slabs of t into one
    #     (TR, TC*16, WL) operand (pure tile moves; WL is 128-aligned), then a
    #     SINGLE batched (TC*16, WL) @ (WL, 128) matmul per ROI, all in f32
    #     (no bf16 recast of the big stage-1 intermediate).
    slabs = [t[:, c * WL:(c + 1) * WL].reshape(TR, S_PAD, WL) for c in range(TC)]
    lhs = slabs[0] if TC == 1 else jnp.concatenate(slabs, axis=1)  # row = c*16 + s
    v = jnp.einsum('rmw,rwn->rmn', lhs, wxt_ref[...],
                   preferred_element_type=jnp.float32)         # (TR, TC*16, 128)

    # channel max within the block (leading-axis elementwise max, pure VPU).
    vmax = jnp.max(v.reshape(TR, TC, S_PAD, NL), axis=1)       # (TR, 16, 128)

    # (3) reduce the two y-sample rows (rows 0..6 vs 8..14; zero pad rows 7/15
    #     are excluded from the max so they can never win it).
    u = jnp.maximum(vmax[:, 0:ROI_SIZE, :],
                    vmax[:, GROUP:GROUP + ROI_SIZE, :])        # (TR, 7, 128)

    # (4) accumulate the channel-block max directly in the resident, lane-dense
    #     output block; it is written back to HBM once per ROI block.
    @pl.when(cb == 0)
    def _():
        out_ref[...] = u

    @pl.when(cb > 0)
    def _():
        out_ref[...] = jnp.maximum(out_ref[...], u)


def roi_align(feature, rois, *, block_rois=16, block_channels=16):
    """feature: (C, H, W), rois: (R, 4) [y0, x0, y1, x1] -> (R, C, 7, 7) f32."""
    feature = feature.astype(jnp.float32)
    rois = rois.astype(jnp.float32)
    C, H, W = feature.shape
    R = rois.shape[0]

    # Separable clamped-bilinear sampling weights (vectorized, O(R*16*(H+W))).
    sh = (rois[:, 2] - rois[:, 0]) / ROI_SIZE
    sw = (rois[:, 3] - rois[:, 1]) / ROI_SIZE
    wy = _bilinear_weights(rois[:, 0], sh, H)                  # (R, 16, H) f32
    wx = _bilinear_weights(rois[:, 1], sw, W)                  # (R, 16, W) f32

    # Tiling: TR*16 is the stage-1 MXU M dim (256 at the default TR=16).  Keep
    # >= 2 ROI blocks when R allows it so the "parallel" axis can shard across
    # v7x's two TensorCores.  TC divides C so no pad channel can win the max.
    TR = min(block_rois, _round_up(max(R, 1), 8))
    R_pad = _round_up(max(R, 1), TR)
    TC = _largest_divisor_leq(C, block_channels)
    CB = C // TC
    WL = _round_up(W, 128)                                     # lane-aligned channel width

    # Operand layouts (all relayout work done once, outside the kernel).
    wy = jnp.pad(wy, ((0, R_pad - R), (0, 0), (0, 0)))
    wy2 = wy.reshape(R_pad * S_PAD, H).astype(jnp.bfloat16)    # rows roi*16 + t_y*8 + m
    # wx pre-transposed to (R_pad, WL, 128) f32: stage 2 is a plain batched matmul
    # with a lane-dense 128-wide N dim (no in-kernel transpose / pad / concat).
    wxt = jnp.transpose(wx, (0, 2, 1))                         # (R, W, 16)
    wxt = jnp.pad(wxt, ((0, R_pad - R), (0, WL - W), (0, NL - S_PAD)))
    # feature as (H, C*WL) bf16, column c*WL + w, W zero-padded to WL so every
    # per-channel slab of the stage-1 result is lane-tile aligned.
    featp = jnp.pad(feature, ((0, 0), (0, 0), (0, WL - W)))    # (C, H, WL)
    feat2 = jnp.transpose(featp, (1, 0, 2)).reshape(H, C * WL).astype(jnp.bfloat16)

    # VMEM budget (double-buffered blocks + in-kernel intermediates); v5e's
    # default scoped limit is only 16 MiB, so raise it explicitly.
    blk_bytes = 2 * (TR * S_PAD * H * 2 + TR * WL * NL * 4
                     + H * TC * WL * 2 + TR * ROI_SIZE * NL * 4)
    tmp_bytes = 2 * TR * S_PAD * TC * WL * 4 + TR * S_PAD * TC * NL * 4
    vmem_limit = int(min(max(blk_bytes + tmp_bytes + (4 << 20), 32 << 20), 64 << 20))

    out = pl.pallas_call(
        _roi_align_kernel,
        out_shape=jax.ShapeDtypeStruct((R_pad, ROI_SIZE, NL), jnp.float32),
        grid=(R_pad // TR, CB),                                # (ROI blocks, channel blocks)
        in_specs=[
            pl.BlockSpec((TR * S_PAD, H), lambda rb, cb: (rb, 0)),   # wy   (per ROI block)
            pl.BlockSpec((TR, WL, NL), lambda rb, cb: (rb, 0, 0)),   # wx^T (per ROI block)
            pl.BlockSpec((H, TC * WL), lambda rb, cb: (0, cb)),      # feature channel block
        ],
        out_specs=pl.BlockSpec((TR, ROI_SIZE, NL), lambda rb, cb: (rb, 0, 0)),
        compiler_params=pltpu.CompilerParams(
            dimension_semantics=("parallel", "arbitrary"),     # ROIs parallel, channels reduce
            vmem_limit_bytes=vmem_limit),
    )(wy2, wxt, feat2)

    # x-sample max (lanes 0..6 vs 8..14) and channel broadcast on the tiny result.
    pooled = jnp.maximum(out[:R, :, 0:ROI_SIZE], out[:R, :, GROUP:GROUP + ROI_SIZE])
    return jnp.broadcast_to(pooled[:, None, :, :], (R, C, ROI_SIZE, ROI_SIZE))


def roi_align_ref(feature, rois):
    """Pure numpy reference mirroring the PyTorch module."""
    feature = np.asarray(feature, dtype=np.float32)
    rois = np.asarray(rois, dtype=np.float32)
    C, H, W = feature.shape
    R = rois.shape[0]
    out = np.zeros((R, C, ROI_SIZE, ROI_SIZE), dtype=np.float32)

    def bilinear(x, y):
        y1 = int(np.floor(y)); y2 = y1 + 1
        x1 = int(np.floor(x)); x2 = x1 + 1
        y1 = min(max(y1, 0), H - 1); y2 = min(max(y2, 0), H - 1)
        x1 = min(max(x1, 0), W - 1); x2 = min(max(x2, 0), W - 1)
        yd = (y - y1, y2 - y)
        xd = (x - x1, x2 - x)
        p = feature[:, y1, x1] * xd[1] + feature[:, y1, x2] * xd[0]
        q = feature[:, y2, x1] * xd[1] + feature[:, y2, x2] * xd[0]
        return p * yd[1] + q * yd[0]

    for i in range(R):
        y0, x0, ye, xe = rois[i]
        sh = (ye - y0) / ROI_SIZE
        sw = (xe - x0) / ROI_SIZE
        for m in range(ROI_SIZE):
            for n in range(ROI_SIZE):
                yb = y0 + sh * m
                xb = x0 + sw * n
                samples = []
                for yy in (yb + sh / 3.0, yb + 2.0 * sh / 3.0):
                    for xx in (xb + sw / 3.0, xb + 2.0 * sw / 3.0):
                        samples.append(bilinear(xx, yy))
                out[i, :, m, n] = np.max(np.stack(samples))
    return out


if __name__ == "__main__":
    key = jax.random.PRNGKey(0)
    kf, kr1, kr2 = jax.random.split(key, 3)
    C, H, W = 4, 16, 16
    R = 8
    feature = jax.random.normal(kf, (C, H, W), dtype=jnp.float32)
    start = jax.random.uniform(kr1, (R, 2), minval=0.0, maxval=8.0)
    extent = jax.random.uniform(kr2, (R, 2), minval=2.0, maxval=7.0)
    # rois rows: [y_start, x_start, y_end, x_end]
    rois = jnp.concatenate([start, start + extent], axis=-1).astype(jnp.float32)

    out = jax.block_until_ready(roi_align(feature, rois))

    ref = roi_align_ref(feature, rois)
    assert out.shape == (R, C, ROI_SIZE, ROI_SIZE)
    np.testing.assert_allclose(np.asarray(out), ref, rtol=2e-2, atol=2e-2)
    print("KERNEL_OK")
</pallas_src>

<mosaic_0001>
module attributes {stable_mosaic.version = 11 : i64} {
  func.func @_roi_align_kernel(%arg0: i32, %arg1: i32, %arg2: memref<128x16xbf16, #tpu.memory_space<vmem>>, %arg3: memref<8x128x128xf32, #tpu.memory_space<vmem>>, %arg4: memref<16x512xbf16, #tpu.memory_space<vmem>>, %arg5: memref<8x7x128xf32, #tpu.memory_space<vmem>>) attributes {dimension_semantics = [#tpu.dimension_semantics<parallel>, #tpu.dimension_semantics<arbitrary>], iteration_bounds = array<i64: 1, 1>, scalar_prefetch = 0 : i64, scratch_operands = 0 : i64, tpu.core_type = #tpu.core_type<tc>, window_params = [{transform_indices = @transform_0, window_bounds = array<i64: 128, 16>}, {transform_indices = @transform_1, window_bounds = array<i64: 8, 128, 128>}, {transform_indices = @transform_2, window_bounds = array<i64: 16, 512>}, {transform_indices = @transform_3, window_bounds = array<i64: 8, 7, 128>}]} {
    %c0 = arith.constant 0 : index
    %c0_0 = arith.constant 0 : index
    %0 = vector.load %arg2[%c0, %c0_0] : memref<128x16xbf16, #tpu.memory_space<vmem>>, vector<128x16xbf16>
    %c0_1 = arith.constant 0 : index
    %c0_2 = arith.constant 0 : index
    %1 = vector.load %arg4[%c0_1, %c0_2] : memref<16x512xbf16, #tpu.memory_space<vmem>>, vector<16x512xbf16>
    %cst = arith.constant dense<0.000000e+00> : vector<128x512xf32>
    %2 = tpu.matmul %0, %1, %cst {dimension_numbers = #tpu.dot_dimension_numbers<[1], [0], [0], [1], [0, 0, 1, 1], [], []>} : vector<128x16xbf16>, vector<16x512xbf16>, vector<128x512xf32> -> vector<128x512xf32>
    %3 = vector.extract_strided_slice %2 {offsets = [0, 0], sizes = [128, 128], strides = [1, 1]} : vector<128x512xf32> to vector<128x128xf32>
    %4 = vector.shape_cast %3 : vector<128x128xf32> to vector<8x16x128xf32>
    %5 = vector.extract_strided_slice %2 {offsets = [0, 128], sizes = [128, 128], strides = [1, 1]} : vector<128x512xf32> to vector<128x128xf32>
    %6 = vector.shape_cast %5 : vector<128x128xf32> to vector<8x16x128xf32>
    %7 = vector.extract_strided_slice %2 {offsets = [0, 256], sizes = [128, 128], strides = [1, 1]} : vector<128x512xf32> to vector<128x128xf32>
    %8 = vector.shape_cast %7 : vector<128x128xf32> to vector<8x16x128xf32>
    %9 = vector.extract_strided_slice %2 {offsets = [0, 384], sizes = [128, 128], strides = [1, 1]} : vector<128x512xf32> to vector<128x128xf32>
    %10 = vector.shape_cast %9 : vector<128x128xf32> to vector<8x16x128xf32>
    %11 = tpu.concatenate %4, %6, %8, %10 in 1 : vector<8x16x128xf32>, vector<8x16x128xf32>, vector<8x16x128xf32>, vector<8x16x128xf32> -> vector<8x64x128xf32>
    %c0_3 = arith.constant 0 : index
    %c0_4 = arith.constant 0 : index
    %c0_5 = arith.constant 0 : index
    %12 = vector.load %arg3[%c0_3, %c0_4, %c0_5] : memref<8x128x128xf32, #tpu.memory_space<vmem>>, vector<8x128x128xf32>
    "tpu.trace_start"() <{level = 10 : i32, message = "rmw,rwn->rmn"}> : () -> ()
    %cst_6 = arith.constant dense<0.000000e+00> : vector<8x64x128xf32>
    %13 = tpu.matmul %11, %12, %cst_6 {dimension_numbers = #tpu.dot_dimension_numbers<[2], [1], [1], [2], [0, 0, 0, 1, 1, 2], [0], [0]>} : vector<8x64x128xf32>, vector<8x128x128xf32>, vector<8x64x128xf32> -> vector<8x64x128xf32>
    "tpu.trace_stop"() : () -> ()
    %14 = vector.shape_cast %13 : vector<8x64x128xf32> to vector<8x4x16x128xf32>
    %cst_7 = arith.constant dense<0xFF800000> : vector<8x16x128xf32>
    %15 = vector.multi_reduction <maximumf>, %14, %cst_7 [1] : vector<8x4x16x128xf32> to vector<8x16x128xf32>
    %16 = vector.extract_strided_slice %15 {offsets = [0, 0, 0], sizes = [8, 7, 128], strides = [1, 1, 1]} : vector<8x16x128xf32> to vector<8x7x128xf32>
    %17 = vector.extract_strided_slice %15 {offsets = [0, 8, 0], sizes = [8, 7, 128], strides = [1, 1, 1]} : vector<8x16x128xf32> to vector<8x7x128xf32>
    %18 = arith.maximumf %16, %17 : vector<8x7x128xf32>
    %c0_i32 = arith.constant 0 : i32
    %19 = arith.cmpi eq, %arg1, %c0_i32 : i32
    %20 = arith.extui %19 : i1 to i32
    %c0_i32_8 = arith.constant 0 : i32
    %21 = arith.cmpi ne, %20, %c0_i32_8 : i32
    scf.if %21 {
      %c0_11 = arith.constant 0 : index
      %c0_12 = arith.constant 0 : index
      %c0_13 = arith.constant 0 : index
      %25 = vector.load %arg5[%c0_11, %c0_12, %c0_13] : memref<8x7x128xf32, #tpu.memory_space<vmem>>, vector<8x7x128xf32>
      tpu.vector_store %arg5[%c0_11, %c0_12, %c0_13], %18 {strides = array<i32>} : memref<8x7x128xf32, #tpu.memory_space<vmem>>, vector<8x7x128xf32>,
    } else {
    }
    %c0_i32_9 = arith.constant 0 : i32
    %22 = arith.cmpi sgt, %arg1, %c0_i32_9 : i32
    %23 = arith.extui %22 : i1 to i32
    %c0_i32_10 = arith.constant 0 : i32
    %24 = arith.cmpi ne, %23, %c0_i32_10 : i32
    scf.if %24 {
      %c0_11 = arith.constant 0 : index
      %c0_12 = arith.constant 0 : index
      %c0_13 = arith.constant 0 : index
      %25 = vector.load %arg5[%c0_11, %c0_12, %c0_13] : memref<8x7x128xf32, #tpu.memory_space<vmem>>, vector<8x7x128xf32>
      %26 = arith.maximumf %25, %18 : vector<8x7x128xf32>
      %c0_14 = arith.constant 0 : index
      %c0_15 = arith.constant 0 : index
      %c0_16 = arith.constant 0 : index
      %27 = vector.load %arg5[%c0_14, %c0_15, %c0_16] : memref<8x7x128xf32, #tpu.memory_space<vmem>>, vector<8x7x128xf32>
      tpu.vector_store %arg5[%c0_14, %c0_15, %c0_16], %26 {strides = array<i32>} : memref<8x7x128xf32, #tpu.memory_space<vmem>>, vector<8x7x128xf32>,
    } else {
    }
    return
  }
  func.func @transform_0(%arg0: i32, %arg1: i32) -> (i32, i32) {
    %c0_i32 = arith.constant 0 : i32
    %c0_i32_0 = arith.constant 0 : i32
    return %arg0, %c0_i32 : i32, i32
  }
  func.func @transform_1(%arg0: i32, %arg1: i32) -> (i32, i32, i32) {
    %c0_i32 = arith.constant 0 : i32
    %c0_i32_0 = arith.constant 0 : i32
    %c0_i32_1 = arith.constant 0 : i32
    return %arg0, %c0_i32, %c0_i32_0 : i32, i32, i32
  }
  func.func @transform_2(%arg0: i32, %arg1: i32) -> (i32, i32) {
    %c0_i32 = arith.constant 0 : i32
    %c0_i32_0 = arith.constant 0 : i32
    return %c0_i32, %arg1 : i32, i32
  }
  func.func @transform_3(%arg0: i32, %arg1: i32) -> (i32, i32, i32) {
    %c0_i32 = arith.constant 0 : i32
    %c0_i32_0 = arith.constant 0 : i32
    %c0_i32_1 = arith.constant 0 : i32
    return %arg0, %c0_i32, %c0_i32_0 : i32, i32, i32
  }
}

</mosaic_0001>

<llo_original>
// kernel: tpu_custom_call.1
$region0: #{tpu_custom_call.1}
  #allocation0 [shape = 'u32[]', space=smem, size = 0x4, offset = 0x4, fixed_abs, tag = 'smem constant byte address 0x4 - core index']
  #allocation1 [shape = 'u32[72,128]{1,0:T(1,128)}', space=vmem, size = 0x9000, scoped, tag = 'internal scratch']
  %s0 = inlined_call_operand.vmem [shape: bf16[128,16], index: 0, kind: input, shape index: {}]
  %s1 = inlined_call_operand.hbm [shape: f32[8,128,128], index: 1, kind: input, shape index: {}]
  %s2 = inlined_call_operand.vmem [shape: bf16[16,512], index: 2, kind: input, shape index: {}]
  %s3 = inlined_call_operand.vmem [shape: f32[8,7,128], index: 3, kind: output, shape index: {}]
  %s4 = sld [smem:[#allocation0]]
  $region34: #{tpu_custom_call.1} parent=0
    _
  %s6 = ssub.s32 1, %s4
  %s7 = scalar_select 0, %s6, %s4
  $region1: #{tpu_custom_call.1} parent=0
    #allocation2 [shape = 'u8[524288]{0}', space=vmem, size = 0x80000, scoped, tag = 'input window, operand 1, single buffered']
    #allocation3 [shape = 's32[1]{0}', space=sflag, size = 0x4, scoped, tag = 'scoped memory for tpu_custom_call.1']
    %8 = vsyncpa [#allocation3], 0
    // Predicated region
    $region2: #{tpu_custom_call.1} parent=1 // pred_check
      _
    $region3: #{tpu_custom_call.1} parent=1 // pred_check_branch
      %10 = sbr.rel (0) target = $region5
    $region4: #{tpu_custom_call.1} parent=1 // pred_region
      _
    $region5: #{tpu_custom_call.1} parent=1 // pred_fallthru
      _
    // Predicated region
    $region6: #{tpu_custom_call.1} parent=1 // pred_check
      _
    $region7: #{tpu_custom_call.1} parent=1 // pred_check_branch
      %12 = sbr.rel (0) target = $region9
    $region8: #{tpu_custom_call.1} parent=1 // pred_region
      %14 = vsyncadd [#allocation3], 0
      %s15 = sshll.u32 %s1, 4
      %s16 = int_to_ptr.hbm [resolvable:$true] %s15
      %s17 = sshll.u32 [#allocation2], 4
      %s18 = int_to_ptr.vmem [resolvable:$true] %s17
      %23 = dma.hbm_to_vmem [thread:$0]  %s16, 16384, %s18, [#allocation3], 128, 128, 8
    $region9: #{tpu_custom_call.1} parent=1 // pred_fallthru
      _
    // Predicated region
    $region10: #{tpu_custom_call.1} parent=1 // pred_check
      _
    $region11: #{tpu_custom_call.1} parent=1 // pred_check_branch
      %25 = sbr.rel (0) target = $region13
    $region12: #{tpu_custom_call.1} parent=1 // pred_region
      _
    $region13: #{tpu_custom_call.1} parent=1 // pred_fallthru
      _
    // Predicated region
    $region14: #{tpu_custom_call.1} parent=1 // pred_check
      _
    $region15: #{tpu_custom_call.1} parent=1 // pred_check_branch
      %27 = sbr.rel (0) target = $region17
    $region16: #{tpu_custom_call.1} parent=1 // pred_region
      %29 = dma.done [#allocation3], 16384
    $region17: #{tpu_custom_call.1} parent=1 // pred_fallthru
      _
    %v31 = vld [vmem:[%s0] sm:$0xf]
    %v32 = vld [vmem:[%s0 + $0x4] sm:$0xf]
    %v33 = vld [vmem:[%s0 + $0x8] sm:$0xf]
    %v34 = vld [vmem:[%s0 + $0xc] sm:$0xf]
    %v35 = vld [vmem:[%s0 + $0x10] sm:$0xf]
    %v36 = vld [vmem:[%s0 + $0x14] sm:$0xf]
    %v37 = vld [vmem:[%s0 + $0x18] sm:$0xf]
    %v38 = vld [vmem:[%s0 + $0x1c] sm:$0xf]
    %v39 = vld [vmem:[%s0 + $0x20] sm:$0xf]
    %v40 = vld [vmem:[%s0 + $0x24] sm:$0xf]
    %v41 = vld [vmem:[%s0 + $0x28] sm:$0xf]
    %v42 = vld [vmem:[%s0 + $0x2c] sm:$0xf]
    %v43 = vld [vmem:[%s0 + $0x30] sm:$0xf]
    %v44 = vld [vmem:[%s0 + $0x34] sm:$0xf]
    %v45 = vld [vmem:[%s0 + $0x38] sm:$0xf]
    %v46 = vld [vmem:[%s0 + $0x3c] sm:$0xf]
    %v47 = vld [vmem:[%s2] sm:$0xff]
    %v48 = vld [vmem:[%s2 + $0x8] sm:$0xff]
    %v49 = vld [vmem:[%s2 + $0x10] sm:$0xff]
    %v50 = vld [vmem:[%s2 + $0x18] sm:$0xff]
    %v67 = vunpack.c.l.b16 %v31
    %v68 = vunpack.c.l.b16 %v32
    %v69 = vunpack.c.l.b16 %v33
    %v70 = vunpack.c.l.b16 %v34
    %v71 = vunpack.c.l.b16 %v35
    %v72 = vunpack.c.l.b16 %v36
    %v73 = vunpack.c.l.b16 %v37
    %v74 = vunpack.c.l.b16 %v38
    %v75 = vunpack.c.l.b16 %v39
    %v76 = vunpack.c.l.b16 %v40
    %v77 = vunpack.c.l.b16 %v41
    %v78 = vunpack.c.l.b16 %v42
    %v79 = vunpack.c.l.b16 %v43
    %v80 = vunpack.c.l.b16 %v44
    %v81 = vunpack.c.l.b16 %v45
    %v82 = vunpack.c.l.b16 %v46
    %v83 = vpack.c.b16 %v68, %v67
    %v84 = vpack.c.b16 %v70, %v69
    %v85 = vpack.c.b16 %v72, %v71
    %v86 = vpack.c.b16 %v74, %v73
    %v87 = vpack.c.b16 %v76, %v75
    %v88 = vpack.c.b16 %v78, %v77
    %v89 = vpack.c.b16 %v80, %v79
    %v90 = vpack.c.b16 %v82, %v81
    %v95 = vunpack.c.l.b16 %v47
    %v96 = vunpack.c.h.b16 %v47
    %v97 = vunpack.c.l.b16 %v48
    %v98 = vunpack.c.h.b16 %v48
    %v99 = vunpack.c.l.b16 %v49
    %v100 = vunpack.c.h.b16 %v49
    %v101 = vunpack.c.l.b16 %v50
    %v102 = vunpack.c.h.b16 %v50
    %v103 = vpack.c.b16 %v99, %v95
    %v104 = vpack.c.b16 %v100, %v96
    %v105 = vpack.c.b16 %v101, %v97
    %v106 = vpack.c.b16 %v102, %v98
    %vm111 = vcmask 130048
    %v113 = vsel %vm111, %v83, 0
    %v116 = vsel %vm111, %v84, 0
    %v119 = vsel %vm111, %v85, 0
    %v122 = vsel %vm111, %v86, 0
    %v125 = vsel %vm111, %v87, 0
    %v128 = vsel %vm111, %v88, 0
    %v131 = vsel %vm111, %v89, 0
    %v134 = vsel %vm111, %v90, 0
    %136 = vmatpush.bf16.msra.mxu0 0
    %137 = vmatpush.bf16.msra.mxu0 0
    %138 = vmatpush.bf16.msra.mxu0 0
    %139 = vmatpush.bf16.msra.mxu0 0
    %140 = vmatpush.bf16.msra.mxu0 0
    %141 = vmatpush.bf16.msra.mxu0 0
    %142 = vmatpush.bf16.msra.mxu0 0
    %143 = vmatpush.bf16.msra.mxu0 %v103
    %144 = vmatmul.bf16.gmra.mxu0 %v113
    %v145 = vpop.f32.mrf.mxu0
    %v146 = vadd.f32 0.0, %v145
    %v147 = vpop.f32.mrf.mxu0
    %v148 = vadd.f32 0.0, %v147
    %149 = vmatmul.bf16.gmra.mxu0 %v116
    %v150 = vpop.f32.mrf.mxu0
    %v151 = vadd.f32 0.0, %v150
    %v152 = vpop.f32.mrf.mxu0
    %v153 = vadd.f32 0.0, %v152
    %154 = vmatmul.bf16.gmra.mxu0 %v119
    %v155 = vpop.f32.mrf.mxu0
    %v156 = vadd.f32 0.0, %v155
    %v157 = vpop.f32.mrf.mxu0
    %v158 = vadd.f32 0.0, %v157
    %159 = vmatmul.bf16.gmra.mxu0 %v122
    %v160 = vpop.f32.mrf.mxu0
    %v161 = vadd.f32 0.0, %v160
    %v162 = vpop.f32.mrf.mxu0
    %v163 = vadd.f32 0.0, %v162
    %164 = vmatmul.bf16.gmra.mxu0 %v125
    %v165 = vpop.f32.mrf.mxu0
    %v166 = vadd.f32 0.0, %v165
    %v167 = vpop.f32.mrf.mxu0
    %v168 = vadd.f32 0.0, %v167
    %169 = vmatmul.bf16.gmra.mxu0 %v128
    %v170 = vpop.f32.mrf.mxu0
    %v171 = vadd.f32 0.0, %v170
    %v172 = vpop.f32.mrf.mxu0
    %v173 = vadd.f32 0.0, %v172
    %174 = vmatmul.bf16.gmra.mxu0 %v131
    %v175 = vpop.f32.mrf.mxu0
    %v176 = vadd.f32 0.0, %v175
    %v177 = vpop.f32.mrf.mxu0
    %v178 = vadd.f32 0.0, %v177
    %179 = vmatmul.bf16.gmra.mxu0 %v134
    %v180 = vpop.f32.mrf.mxu0
    %v181 = vadd.f32 0.0, %v180
    %v182 = vpop.f32.mrf.mxu0
    %v183 = vadd.f32 0.0, %v182
    %184 = vdwg.mxu0
    %185 = vmatpush.bf16.msra.mxu0 0
    %186 = vmatpush.bf16.msra.mxu0 0
    %187 = vmatpush.bf16.msra.mxu0 0
    %188 = vmatpush.bf16.msra.mxu0 0
    %189 = vmatpush.bf16.msra.mxu0 0
    %190 = vmatpush.bf16.msra.mxu0 0
    %191 = vmatpush.bf16.msra.mxu0 0
    %192 = vmatpush.bf16.msra.mxu0 %v104
    %193 = vmatmul.bf16.gmra.mxu0 %v113
    %v194 = vpop.f32.mrf.mxu0
    %v195 = vadd.f32 0.0, %v194
    %v196 = vpop.f32.mrf.mxu0
    %v197 = vadd.f32 0.0, %v196
    %198 = vmatmul.bf16.gmra.mxu0 %v116
    %v199 = vpop.f32.mrf.mxu0
    %v200 = vadd.f32 0.0, %v199
    %v201 = vpop.f32.mrf.mxu0
    %v202 = vadd.f32 0.0, %v201
    %203 = vmatmul.bf16.gmra.mxu0 %v119
    %v204 = vpop.f32.mrf.mxu0
    %v205 = vadd.f32 0.0, %v204
    %v206 = vpop.f32.mrf.mxu0
    %v207 = vadd.f32 0.0, %v206
    %208 = vmatmul.bf16.gmra.mxu0 %v122
    %v209 = vpop.f32.mrf.mxu0
    %v210 = vadd.f32 0.0, %v209
    %v211 = vpop.f32.mrf.mxu0
    %v212 = vadd.f32 0.0, %v211
    %213 = vmatmul.bf16.gmra.mxu0 %v125
    %v214 = vpop.f32.mrf.mxu0
    %v215 = vadd.f32 0.0, %v214
    %v216 = vpop.f32.mrf.mxu0
    %v217 = vadd.f32 0.0, %v216
    %218 = vmatmul.bf16.gmra.mxu0 %v128
    %v219 = vpop.f32.mrf.mxu0
    %v220 = vadd.f32 0.0, %v219
    %v221 = vpop.f32.mrf.mxu0
    %v222 = vadd.f32 0.0, %v221
    %223 = vmatmul.bf16.gmra.mxu0 %v131
    %v224 = vpop.f32.mrf.mxu0
    %v225 = vadd.f32 0.0, %v224
    %v226 = vpop.f32.mrf.mxu0
    %v227 = vadd.f32 0.0, %v226
    %228 = vmatmul.bf16.gmra.mxu0 %v134
    %v229 = vpop.f32.mrf.mxu0
    %v230 = vadd.f32 0.0, %v229
    %v231 = vpop.f32.mrf.mxu0
    %v232 = vadd.f32 0.0, %v231
    %233 = vdwg.mxu0
    %234 = vmatpush.bf16.msra.mxu0 0
    %235 = vmatpush.bf16.msra.mxu0 0
    %236 = vmatpush.bf16.msra.mxu0 0
    %237 = vmatpush.bf16.msra.mxu0 0
    %238 = vmatpush.bf16.msra.mxu0 0
    %239 = vmatpush.bf16.msra.mxu0 0
    %240 = vmatpush.bf16.msra.mxu0 0
    %241 = vmatpush.bf16.msra.mxu0 %v105
    %242 = vmatmul.bf16.gmra.mxu0 %v113
    %v243 = vpop.f32.mrf.mxu0
    %v244 = vadd.f32 0.0, %v243
    %v245 = vpop.f32.mrf.mxu0
    %v246 = vadd.f32 0.0, %v245
    %247 = vmatmul.bf16.gmra.mxu0 %v116
    %v248 = vpop.f32.mrf.mxu0
    %v249 = vadd.f32 0.0, %v248
    %v250 = vpop.f32.mrf.mxu0
    %v251 = vadd.f32 0.0, %v250
    %252 = vmatmul.bf16.gmra.mxu0 %v119
    %v253 = vpop.f32.mrf.mxu0
    %v254 = vadd.f32 0.0, %v253
    %v255 = vpop.f32.mrf.mxu0
    %v256 = vadd.f32 0.0, %v255
    %257 = vmatmul.bf16.gmra.mxu0 %v122
    %v258 = vpop.f32.mrf.mxu0
    %v259 = vadd.f32 0.0, %v258
    %v260 = vpop.f32.mrf.mxu0
    %v261 = vadd.f32 0.0, %v260
    %262 = vmatmul.bf16.gmra.mxu0 %v125
    %v263 = vpop.f32.mrf.mxu0
    %v264 = vadd.f32 0.0, %v263
    %v265 = vpop.f32.mrf.mxu0
    %v266 = vadd.f32 0.0, %v265
    %267 = vmatmul.bf16.gmra.mxu0 %v128
    %v268 = vpop.f32.mrf.mxu0
    %v269 = vadd.f32 0.0, %v268
    %v270 = vpop.f32.mrf.mxu0
    %v271 = vadd.f32 0.0, %v270
    %272 = vmatmul.bf16.gmra.mxu0 %v131
    %v273 = vpop.f32.mrf.mxu0
    %v274 = vadd.f32 0.0, %v273
    %v275 = vpop.f32.mrf.mxu0
    %v276 = vadd.f32 0.0, %v275
    %277 = vmatmul.bf16.gmra.mxu0 %v134
    %v278 = vpop.f32.mrf.mxu0
    %v279 = vadd.f32 0.0, %v278
    %v280 = vpop.f32.mrf.mxu0
    %v281 = vadd.f32 0.0, %v280
    %282 = vdwg.mxu0
    %283 = vmatpush.bf16.msra.mxu0 0
    %284 = vmatpush.bf16.msra.mxu0 0
    %285 = vmatpush.bf16.msra.mxu0 0
    %286 = vmatpush.bf16.msra.mxu0 0
    %287 = vmatpush.bf16.msra.mxu0 0
    %288 = vmatpush.bf16.msra.mxu0 0
    %289 = vmatpush.bf16.msra.mxu0 0
    %290 = vmatpush.bf16.msra.mxu0 %v106
    %291 = vmatmul.bf16.gmra.mxu0 %v113
    %v292 = vpop.f32.mrf.mxu0
    %v293 = vadd.f32 0.0, %v292
    %v294 = vpop.f32.mrf.mxu0
    %v295 = vadd.f32 0.0, %v294
    %296 = vmatmul.bf16.gmra.mxu0 %v116
    %v297 = vpop.f32.mrf.mxu0
    %v298 = vadd.f32 0.0, %v297
    %v299 = vpop.f32.mrf.mxu0
    %v300 = vadd.f32 0.0, %v299
    %301 = vmatmul.bf16.gmra.mxu0 %v119
    %v302 = vpop.f32.mrf.mxu0
    %v303 = vadd.f32 0.0, %v302
    %v304 = vpop.f32.mrf.mxu0
    %v305 = vadd.f32 0.0, %v304
    %306 = vmatmul.bf16.gmra.mxu0 %v122
    %v307 = vpop.f32.mrf.mxu0
    %v308 = vadd.f32 0.0, %v307
    %v309 = vpop.f32.mrf.mxu0
    %v310 = vadd.f32 0.0, %v309
    %311 = vmatmul.bf16.gmra.mxu0 %v125
    %v312 = vpop.f32.mrf.mxu0
    %v313 = vadd.f32 0.0, %v312
    %v314 = vpop.f32.mrf.mxu0
    %v315 = vadd.f32 0.0, %v314
    %316 = vmatmul.bf16.gmra.mxu0 %v128
    %v317 = vpop.f32.mrf.mxu0
    %v318 = vadd.f32 0.0, %v317
    %v319 = vpop.f32.mrf.mxu0
    %v320 = vadd.f32 0.0, %v319
    %321 = vmatmul.bf16.gmra.mxu0 %v131
    %v322 = vpop.f32.mrf.mxu0
    %v323 = vadd.f32 0.0, %v322
    %v324 = vpop.f32.mrf.mxu0
    %v325 = vadd.f32 0.0, %v324
    %326 = vmatmul.bf16.gmra.mxu0 %v134
    %v327 = vpop.f32.mrf.mxu0
    %v328 = vadd.f32 0.0, %v327
    %v329 = vpop.f32.mrf.mxu0
    %v330 = vadd.f32 0.0, %v329
    %331 = vdwg.mxu0
    %v332 = vld [vmem:[#allocation2] sm:$0xff]
    %v333 = vld [vmem:[#allocation2 + $0x8] sm:$0xff]
    %v334 = vld [vmem:[#allocation2 + $0x10] sm:$0xff]
    %v335 = vld [vmem:[#allocation2 + $0x18] sm:$0xff]
    %v336 = vld [vmem:[#allocation2 + $0x20] sm:$0xff]
    %v337 = vld [vmem:[#allocation2 + $0x28] sm:$0xff]
    %v338 = vld [vmem:[#allocation2 + $0x30] sm:$0xff]
    %v339 = vld [vmem:[#allocation2 + $0x38] sm:$0xff]
    %v340 = vld [vmem:[#allocation2 + $0x40] sm:$0xff]
    %v341 = vld [vmem:[#allocation2 + $0x48] sm:$0xff]
    %v342 = vld [vmem:[#allocation2 + $0x50] sm:$0xff]
    %v343 = vld [vmem:[#allocation2 + $0x58] sm:$0xff]
    %v344 = vld [vmem:[#allocation2 + $0x60] sm:$0xff]
    %v345 = vld [vmem:[#allocation2 + $0x68] sm:$0xff]
    %v346 = vld [vmem:[#allocation2 + $0x70] sm:$0xff]
    %v347 = vld [vmem:[#allocation2 + $0x78] sm:$0xff]
    %v348 = vld [vmem:[#allocation2 + $0x80] sm:$0xff]
    %v349 = vld [vmem:[#allocation2 + $0x88] sm:$0xff]
    %v350 = vld [vmem:[#allocation2 + $0x90] sm:$0xff]
    %v351 = vld [vmem:[#allocation2 + $0x98] sm:$0xff]
    %v352 = vld [vmem:[#allocation2 + $0xa0] sm:$0xff]
    %v353 = vld [vmem:[#allocation2 + $0xa8] sm:$0xff]
    %v354 = vld [vmem:[#allocation2 + $0xb0] sm:$0xff]
    %v355 = vld [vmem:[#allocation2 + $0xb8] sm:$0xff]
    %v356 = vld [vmem:[#allocation2 + $0xc0] sm:$0xff]
    %v357 = vld [vmem:[#allocation2 + $0xc8] sm:$0xff]
    %v358 = vld [vmem:[#allocation2 + $0xd0] sm:$0xff]
    %v359 = vld [vmem:[#allocation2 + $0xd8] sm:$0xff]
    %v360 = vld [vmem:[#allocation2 + $0xe0] sm:$0xff]
    %v361 = vld [vmem:[#allocation2 + $0xe8] sm:$0xff]
    %v362 = vld [vmem:[#allocation2 + $0xf0] sm:$0xff]
    %v363 = vld [vmem:[#allocation2 + $0xf8] sm:$0xff]
    %v364 = vld [vmem:[#allocation2 + $0x100] sm:$0xff]
    %v365 = vld [vmem:[#allocation2 + $0x108] sm:$0xff]
    %v366 = vld [vmem:[#allocation2 + $0x110] sm:$0xff]
    %v367 = vld [vmem:[#allocation2 + $0x118] sm:$0xff]
    %v368 = vld [vmem:[#allocation2 + $0x120] sm:$0xff]
    %v369 = vld [vmem:[#allocation2 + $0x128] sm:$0xff]
    %v370 = vld [vmem:[#allocation2 + $0x130] sm:$0xff]
    %v371 = vld [vmem:[#allocation2 + $0x138] sm:$0xff]
    %v372 = vld [vmem:[#allocation2 + $0x140] sm:$0xff]
    %v373 = vld [vmem:[#allocation2 + $0x148] sm:$0xff]
    %v374 = vld [vmem:[#allocation2 + $0x150] sm:$0xff]
    %v375 = vld [vmem:[#allocation2 + $0x158] sm:$0xff]
    %v376 = vld [vmem:[#allocation2 + $0x160] sm:$0xff]
    %v377 = vld [vmem:[#allocation2 + $0x168] sm:$0xff]
    %v378 = vld [vmem:[#allocation2 + $0x170] sm:$0xff]
    %v379 = vld [vmem:[#allocation2 + $0x178] sm:$0xff]
    %v380 = vld [vmem:[#allocation2 + $0x180] sm:$0xff]
    %v381 = vld [vmem:[#allocation2 + $0x188] sm:$0xff]
    %v382 = vld [vmem:[#allocation2 + $0x190] sm:$0xff]
    %v383 = vld [vmem:[#allocation2 + $0x198] sm:$0xff]
    %v384 = vld [vmem:[#allocation2 + $0x1a0] sm:$0xff]
    %v385 = vld [vmem:[#allocation2 + $0x1a8] sm:$0xff]
    %v386 = vld [vmem:[#allocation2 + $0x1b0] sm:$0xff]
    %v387 = vld [vmem:[#allocation2 + $0x1b8] sm:$0xff]
    %v388 = vld [vmem:[#allocation2 + $0x1c0] sm:$0xff]
    %v389 = vld [vmem:[#allocation2 + $0x1c8] sm:$0xff]
    %v390 = vld [vmem:[#allocation2 + $0x1d0] sm:$0xff]
    %v391 = vld [vmem:[#allocation2 + $0x1d8] sm:$0xff]
    %v392 = vld [vmem:[#allocation2 + $0x1e0] sm:$0xff]
    %v393 = vld [vmem:[#allocation2 + $0x1e8] sm:$0xff]
    %v394 = vld [vmem:[#allocation2 + $0x1f0] sm:$0xff]
    %v395 = vld [vmem:[#allocation2 + $0x1f8] sm:$0xff]
    %v396 = vld [vmem:[#allocation2 + $0x200] sm:$0xff]
    %v397 = vld [vmem:[#allocation2 + $0x208] sm:$0xff]
    %v398 = vld [vmem:[#allocation2 + $0x210] sm:$0xff]
    %v399 = vld [vmem:[#allocation2 + $0x218] sm:$0xff]
    %v400 = vld [vmem:[#allocation2 + $0x220] sm:$0xff]
    %v401 = vld [vmem:[#allocation2 + $0x228] sm:$0xff]
    %v402 = vld [vmem:[#allocation2 + $0x230] sm:$0xff]
    %v403 = vld [vmem:[#allocation2 + $0x238] sm:$0xff]
    %v404 = vld [vmem:[#allocation2 + $0x240] sm:$0xff]
    %v405 = vld [vmem:[#allocation2 + $0x248] sm:$0xff]
    %v406 = vld [vmem:[#allocation2 + $0x250] sm:$0xff]
    %v407 = vld [vmem:[#allocation2 + $0x258] sm:$0xff]
    %v408 = vld [vmem:[#allocation2 + $0x260] sm:$0xff]
    %v409 = vld [vmem:[#allocation2 + $0x268] sm:$0xff]
    %v410 = vld [vmem:[#allocation2 + $0x270] sm:$0xff]
    %v411 = vld [vmem:[#allocation2 + $0x278] sm:$0xff]
    %v412 = vld [vmem:[#allocation2 + $0x280] sm:$0xff]
    %v413 = vld [vmem:[#allocation2 + $0x288] sm:$0xff]
    %v414 = vld [vmem:[#allocation2 + $0x290] sm:$0xff]
    %v415 = vld [vmem:[#allocation2 + $0x298] sm:$0xff]
    %v416 = vld [vmem:[#allocation2 + $0x2a0] sm:$0xff]
    %v417 = vld [vmem:[#allocation2 + $0x2a8] sm:$0xff]
    %v418 = vld [vmem:[#allocation2 + $0x2b0] sm:$0xff]
    %v419 = vld [vmem:[#allocation2 + $0x2b8] sm:$0xff]
    %v420 = vld [vmem:[#allocation2 + $0x2c0] sm:$0xff]
    %v421 = vld [vmem:[#allocation2 + $0x2c8] sm:$0xff]
    %v422 = vld [vmem:[#allocation2 + $0x2d0] sm:$0xff]
    %v423 = vld [vmem:[#allocation2 + $0x2d8] sm:$0xff]
    %v424 = vld [vmem:[#allocation2 + $0x2e0] sm:$0xff]
    %v425 = vld [vmem:[#allocation2 + $0x2e8] sm:$0xff]
    %v426 = vld [vmem:[#allocation2 + $0x2f0] sm:$0xff]
    %v427 = vld [vmem:[#allocation2 + $0x2f8] sm:$0xff]
    %v428 = vld [vmem:[#allocation2 + $0x300] sm:$0xff]
    %v429 = vld [vmem:[#allocation2 + $0x308] sm:$0xff]
    %v430 = vld [vmem:[#allocation2 + $0x310] sm:$0xff]
    %v431 = vld [vmem:[#allocation2 + $0x318] sm:$0xff]
    %v432 = vld [vmem:[#allocation2 + $0x320] sm:$0xff]
    %v433 = vld [vmem:[#allocation2 + $0x328] sm:$0xff]
    %v434 = vld [vmem:[#allocation2 + $0x330] sm:$0xff]
    %v435 = vld [vmem:[#allocation2 + $0x338] sm:$0xff]
    %v436 = vld [vmem:[#allocation2 + $0x340] sm:$0xff]
    %v437 = vld [vmem:[#allocation2 + $0x348] sm:$0xff]
    %v438 = vld [vmem:[#allocation2 + $0x350] sm:$0xff]
    %v439 = vld [vmem:[#allocation2 + $0x358] sm:$0xff]
    %v440 = vld [vmem:[#allocation2 + $0x360] sm:$0xff]
    %v441 = vld [vmem:[#allocation2 + $0x368] sm:$0xff]
    %v442 = vld [vmem:[#allocation2 + $0x370] sm:$0xff]
    %v443 = vld [vmem:[#allocation2 + $0x378] sm:$0xff]
    %v444 = vld [vmem:[#allocation2 + $0x380] sm:$0xff]
    %v445 = vld [vmem:[#allocation2 + $0x388] sm:$0xff]
    %v446 = vld [vmem:[#allocation2 + $0x390] sm:$0xff]
    %v447 = vld [vmem:[#allocation2 + $0x398] sm:$0xff]
    %v448 = vld [vmem:[#allocation2 + $0x3a0] sm:$0xff]
    %v449 = vld [vmem:[#allocation2 + $0x3a8] sm:$0xff]
    %v450 = vld [vmem:[#allocation2 + $0x3b0] sm:$0xff]
    %v451 = vld [vmem:[#allocation2 + $0x3b8] sm:$0xff]
    %v452 = vld [vmem:[#allocation2 + $0x3c0] sm:$0xff]
    %v453 = vld [vmem:[#allocation2 + $0x3c8] sm:$0xff]
    %v454 = vld [vmem:[#allocation2 + $0x3d0] sm:$0xff]
    %v455 = vld [vmem:[#allocation2 + $0x3d8] sm:$0xff]
    %v456 = vld [vmem:[#allocation2 + $0x3e0] sm:$0xff]
    %v457 = vld [vmem:[#allocation2 + $0x3e8] sm:$0xff]
    %v458 = vld [vmem:[#allocation2 + $0x3f0] sm:$0xff]
    %v459 = vld [vmem:[#allocation2 + $0x3f8] sm:$0xff]
    %460 = vmatpush.msra.mxu0 %v347
    %461 = vmatpush.msra.mxu0 %v346
    %462 = vmatpush.msra.mxu0 %v345
    %463 = vmatpush.msra.mxu0 %v344
    %464 = vmatpush.msra.mxu0 %v343
    %465 = vmatpush.msra.mxu0 %v342
    %466 = vmatpush.msra.mxu0 %v341
    %467 = vmatpush.msra.mxu0 %v340
    %468 = vmatpush.msra.mxu0 %v339
    %469 = vmatpush.msra.mxu0 %v338
    %470 = vmatpush.msra.mxu0 %v337
    %471 = vmatpush.msra.mxu0 %v336
    %472 = vmatpush.msra.mxu0 %v335
    %473 = vmatpush.msra.mxu0 %v334
    %474 = vmatpush.msra.mxu0 %v333
    %475 = vmatpush.msra.mxu0 %v332
    %476 = vmatmul.f32.gmra.mxu0 %v146
    %v477 = vpop.f32.mrf.mxu0
    %v478 = vadd.f32 0.0, %v477
    %479 = vmatmul.f32.gmra.mxu0 %v148
    %v480 = vpop.f32.mrf.mxu0
    %v481 = vadd.f32 0.0, %v480
    %482 = vmatmul.f32.gmra.mxu0 %v195
    %v483 = vpop.f32.mrf.mxu0
    %v484 = vadd.f32 0.0, %v483
    %485 = vmatmul.f32.gmra.mxu0 %v197
    %v486 = vpop.f32.mrf.mxu0
    %v487 = vadd.f32 0.0, %v486
    %488 = vmatmul.f32.gmra.mxu0 %v244
    %v489 = vpop.f32.mrf.mxu0
    %v490 = vadd.f32 0.0, %v489
    %491 = vmatmul.f32.gmra.mxu0 %v246
    %v492 = vpop.f32.mrf.mxu0
    %v493 = vadd.f32 0.0, %v492
    %494 = vmatmul.f32.gmra.mxu0 %v293
    %v495 = vpop.f32.mrf.mxu0
    %v496 = vadd.f32 0.0, %v495
    %497 = vmatmul.f32.gmra.mxu0 %v295
    %v498 = vpop.f32.mrf.mxu0
    %v499 = vadd.f32 0.0, %v498
    %500 = vdwg.mxu0
    %501 = vmatpush.msra.mxu0 %v363
    %502 = vmatpush.msra.mxu0 %v362
    %503 = vmatpush.msra.mxu0 %v361
    %504 = vmatpush.msra.mxu0 %v360
    %505 = vmatpush.msra.mxu0 %v359
    %506 = vmatpush.msra.mxu0 %v358
    %507 = vmatpush.msra.mxu0 %v357
    %508 = vmatpush.msra.mxu0 %v356
    %509 = vmatpush.msra.mxu0 %v355
    %510 = vmatpush.msra.mxu0 %v354
    %511 = vmatpush.msra.mxu0 %v353
    %512 = vmatpush.msra.mxu0 %v352
    %513 = vmatpush.msra.mxu0 %v351
    %514 = vmatpush.msra.mxu0 %v350
    %515 = vmatpush.msra.mxu0 %v349
    %516 = vmatpush.msra.mxu0 %v348
    %517 = vmatmul.f32.gmra.mxu0 %v151
    %v518 = vpop.f32.mrf.mxu0
    %v519 = vadd.f32 0.0, %v518
    %520 = vmatmul.f32.gmra.mxu0 %v153
    %v521 = vpop.f32.mrf.mxu0
    %v522 = vadd.f32 0.0, %v521
    %523 = vmatmul.f32.gmra.mxu0 %v200
    %v524 = vpop.f32.mrf.mxu0
    %v525 = vadd.f32 0.0, %v524
    %526 = vmatmul.f32.gmra.mxu0 %v202
    %v527 = vpop.f32.mrf.mxu0
    %v528 = vadd.f32 0.0, %v527
    %529 = vmatmul.f32.gmra.mxu0 %v249
    %v530 = vpop.f32.mrf.mxu0
    %v531 = vadd.f32 0.0, %v530
    %532 = vmatmul.f32.gmra.mxu0 %v251
    %v533 = vpop.f32.mrf.mxu0
    %v534 = vadd.f32 0.0, %v533
    %535 = vmatmul.f32.gmra.mxu0 %v298
    %v536 = vpop.f32.mrf.mxu0
    %v537 = vadd.f32 0.0, %v536
    %538 = vmatmul.f32.gmra.mxu0 %v300
    %v539 = vpop.f32.mrf.mxu0
    %v540 = vadd.f32 0.0, %v539
    %541 = vdwg.mxu0
    %542 = vmatpush.msra.mxu0 %v379
    %543 = vmatpush.msra.mxu0 %v378
    %544 = vmatpush.msra.mxu0 %v377
    %545 = vmatpush.msra.mxu0 %v376
    %546 = vmatpush.msra.mxu0 %v375
    %547 = vmatpush.msra.mxu0 %v374
    %548 = vmatpush.msra.mxu0 %v373
    %549 = vmatpush.msra.mxu0 %v372
    %550 = vmatpush.msra.mxu0 %v371
    %551 = vmatpush.msra.mxu0 %v370
    %552 = vmatpush.msra.mxu0 %v369
    %553 = vmatpush.msra.mxu0 %v368
    %554 = vmatpush.msra.mxu0 %v367
    %555 = vmatpush.msra.mxu0 %v366
    %556 = vmatpush.msra.mxu0 %v365
    %557 = vmatpush.msra.mxu0 %v364
    %558 = vmatmul.f32.gmra.mxu0 %v156
    %v559 = vpop.f32.mrf.mxu0
    %v560 = vadd.f32 0.0, %v559
    %561 = vmatmul.f32.gmra.mxu0 %v158
    %v562 = vpop.f32.mrf.mxu0
    %v563 = vadd.f32 0.0, %v562
    %564 = vmatmul.f32.gmra.mxu0 %v205
    %v565 = vpop.f32.mrf.mxu0
    %v566 = vadd.f32 0.0, %v565
    %567 = vmatmul.f32.gmra.mxu0 %v207
    %v568 = vpop.f32.mrf.mxu0
    %v569 = vadd.f32 0.0, %v568
    %570 = vmatmul.f32.gmra.mxu0 %v254
    %v571 = vpop.f32.mrf.mxu0
    %v572 = vadd.f32 0.0, %v571
    %573 = vmatmul.f32.gmra.mxu0 %v256
    %v574 = vpop.f32.mrf.mxu0
    %v575 = vadd.f32 0.0, %v574
    %576 = vmatmul.f32.gmra.mxu0 %v303
    %v577 = vpop.f32.mrf.mxu0
    %v578 = vadd.f32 0.0, %v577
    %579 = vmatmul.f32.gmra.mxu0 %v305
    %v580 = vpop.f32.mrf.mxu0
    %v581 = vadd.f32 0.0, %v580
    %582 = vdwg.mxu0
    %583 = vmatpush.msra.mxu0 %v395
    %584 = vmatpush.msra.mxu0 %v394
    %585 = vmatpush.msra.mxu0 %v393
    %586 = vmatpush.msra.mxu0 %v392
    %587 = vmatpush.msra.mxu0 %v391
    %588 = vmatpush.msra.mxu0 %v390
    %589 = vmatpush.msra.mxu0 %v389
    %590 = vmatpush.msra.mxu0 %v388
    %591 = vmatpush.msra.mxu0 %v387
    %592 = vmatpush.msra.mxu0 %v386
    %593 = vmatpush.msra.mxu0 %v385
    %594 = vmatpush.msra.mxu0 %v384
    %595 = vmatpush.msra.mxu0 %v383
    %596 = vmatpush.msra.mxu0 %v382
    %597 = vmatpush.msra.mxu0 %v381
    %598 = vmatpush.msra.mxu0 %v380
    %599 = vmatmul.f32.gmra.mxu0 %v161
    %v600 = vpop.f32.mrf.mxu0
    %v601 = vadd.f32 0.0, %v600
    %602 = vmatmul.f32.gmra.mxu0 %v163
    %v603 = vpop.f32.mrf.mxu0
    %v604 = vadd.f32 0.0, %v603
    %605 = vmatmul.f32.gmra.mxu0 %v210
    %v606 = vpop.f32.mrf.mxu0
    %v607 = vadd.f32 0.0, %v606
    %608 = vmatmul.f32.gmra.mxu0 %v212
    %v609 = vpop.f32.mrf.mxu0
    %v610 = vadd.f32 0.0, %v609
    %611 = vmatmul.f32.gmra.mxu0 %v259
    %v612 = vpop.f32.mrf.mxu0
    %v613 = vadd.f32 0.0, %v612
    %614 = vmatmul.f32.gmra.mxu0 %v261
    %v615 = vpop.f32.mrf.mxu0
    %v616 = vadd.f32 0.0, %v615
    %617 = vmatmul.f32.gmra.mxu0 %v308
    %v618 = vpop.f32.mrf.mxu0
    %v619 = vadd.f32 0.0, %v618
    %620 = vmatmul.f32.gmra.mxu0 %v310
    %v621 = vpop.f32.mrf.mxu0
    %v622 = vadd.f32 0.0, %v621
    %623 = vdwg.mxu0
    %624 = vmatpush.msra.mxu0 %v411
    %625 = vmatpush.msra.mxu0 %v410
    %626 = vmatpush.msra.mxu0 %v409
    %627 = vmatpush.msra.mxu0 %v408
    %628 = vmatpush.msra.mxu0 %v407
    %629 = vmatpush.msra.mxu0 %v406
    %630 = vmatpush.msra.mxu0 %v405
    %631 = vmatpush.msra.mxu0 %v404
    %632 = vmatpush.msra.mxu0 %v403
    %633 = vmatpush.msra.mxu0 %v402
    %634 = vmatpush.msra.mxu0 %v401
    %635 = vmatpush.msra.mxu0 %v400
    %636 = vmatpush.msra.mxu0 %v399
    %637 = vmatpush.msra.mxu0 %v398
    %638 = vmatpush.msra.mxu0 %v397
    %639 = vmatpush.msra.mxu0 %v396
    %640 = vmatmul.f32.gmra.mxu0 %v166
    %v641 = vpop.f32.mrf.mxu0
    %v642 = vadd.f32 0.0, %v641
    %643 = vmatmul.f32.gmra.mxu0 %v168
    %v644 = vpop.f32.mrf.mxu0
    %v645 = vadd.f32 0.0, %v644
    %646 = vmatmul.f32.gmra.mxu0 %v215
    %v647 = vpop.f32.mrf.mxu0
    %v648 = vadd.f32 0.0, %v647
    %649 = vmatmul.f32.gmra.mxu0 %v217
    %v650 = vpop.f32.mrf.mxu0
    %v651 = vadd.f32 0.0, %v650
    %652 = vmatmul.f32.gmra.mxu0 %v264
    %v653 = vpop.f32.mrf.mxu0
    %v654 = vadd.f32 0.0, %v653
    %655 = vmatmul.f32.gmra.mxu0 %v266
    %v656 = vpop.f32.mrf.mxu0
    %v657 = vadd.f32 0.0, %v656
    %658 = vmatmul.f32.gmra.mxu0 %v313
    %v659 = vpop.f32.mrf.mxu0
    %v660 = vadd.f32 0.0, %v659
    %661 = vmatmul.f32.gmra.mxu0 %v315
    %v662 = vpop.f32.mrf.mxu0
    %v663 = vadd.f32 0.0, %v662
    %664 = vdwg.mxu0
    %665 = vmatpush.msra.mxu0 %v427
    %666 = vmatpush.msra.mxu0 %v426
    %667 = vmatpush.msra.mxu0 %v425
    %668 = vmatpush.msra.mxu0 %v424
    %669 = vmatpush.msra.mxu0 %v423
    %670 = vmatpush.msra.mxu0 %v422
    %671 = vmatpush.msra.mxu0 %v421
    %672 = vmatpush.msra.mxu0 %v420
    %673 = vmatpush.msra.mxu0 %v419
    %674 = vmatpush.msra.mxu0 %v418
    %675 = vmatpush.msra.mxu0 %v417
    %676 = vmatpush.msra.mxu0 %v416
    %677 = vmatpush.msra.mxu0 %v415
    %678 = vmatpush.msra.mxu0 %v414
    %679 = vmatpush.msra.mxu0 %v413
    %680 = vmatpush.msra.mxu0 %v412
    %681 = vmatmul.f32.gmra.mxu0 %v171
    %v682 = vpop.f32.mrf.mxu0
    %v683 = vadd.f32 0.0, %v682
    %684 = vmatmul.f32.gmra.mxu0 %v173
    %v685 = vpop.f32.mrf.mxu0
    %v686 = vadd.f32 0.0, %v685
    %687 = vmatmul.f32.gmra.mxu0 %v220
    %v688 = vpop.f32.mrf.mxu0
    %v689 = vadd.f32 0.0, %v688
    %690 = vmatmul.f32.gmra.mxu0 %v222
    %v691 = vpop.f32.mrf.mxu0
    %v692 = vadd.f32 0.0, %v691
    %693 = vmatmul.f32.gmra.mxu0 %v269
    %v694 = vpop.f32.mrf.mxu0
    %v695 = vadd.f32 0.0, %v694
    %696 = vmatmul.f32.gmra.mxu0 %v271
    %v697 = vpop.f32.mrf.mxu0
    %v698 = vadd.f32 0.0, %v697
    %699 = vmatmul.f32.gmra.mxu0 %v318
    %v700 = vpop.f32.mrf.mxu0
    %v701 = vadd.f32 0.0, %v700
    %702 = vmatmul.f32.gmra.mxu0 %v320
    %v703 = vpop.f32.mrf.mxu0
    %v704 = vadd.f32 0.0, %v703
    %705 = vdwg.mxu0
    %706 = vmatpush.msra.mxu0 %v443
    %707 = vmatpush.msra.mxu0 %v442
    %708 = vmatpush.msra.mxu0 %v441
    %709 = vmatpush.msra.mxu0 %v440
    %710 = vmatpush.msra.mxu0 %v439
    %711 = vmatpush.msra.mxu0 %v438
    %712 = vmatpush.msra.mxu0 %v437
    %713 = vmatpush.msra.mxu0 %v436
    %714 = vmatpush.msra.mxu0 %v435
    %715 = vmatpush.msra.mxu0 %v434
    %716 = vmatpush.msra.mxu0 %v433
    %717 = vmatpush.msra.mxu0 %v432
    %718 = vmatpush.msra.mxu0 %v431
    %719 = vmatpush.msra.mxu0 %v430
    %720 = vmatpush.msra.mxu0 %v429
    %721 = vmatpush.msra.mxu0 %v428
    %722 = vmatmul.f32.gmra.mxu0 %v176
    %v723 = vpop.f32.mrf.mxu0
    %v724 = vadd.f32 0.0, %v723
    %725 = vmatmul.f32.gmra.mxu0 %v178
    %v726 = vpop.f32.mrf.mxu0
    %v727 = vadd.f32 0.0, %v726
    %728 = vmatmul.f32.gmra.mxu0 %v225
    %v729 = vpop.f32.mrf.mxu0
    %v730 = vadd.f32 0.0, %v729
    %731 = vmatmul.f32.gmra.mxu0 %v227
    %v732 = vpop.f32.mrf.mxu0
    %v733 = vadd.f32 0.0, %v732
    %734 = vmatmul.f32.gmra.mxu0 %v274
    %v735 = vpop.f32.mrf.mxu0
    %v736 = vadd.f32 0.0, %v735
    %737 = vmatmul.f32.gmra.mxu0 %v276
    %v738 = vpop.f32.mrf.mxu0
    %v739 = vadd.f32 0.0, %v738
    %740 = vmatmul.f32.gmra.mxu0 %v323
    %v741 = vpop.f32.mrf.mxu0
    %v742 = vadd.f32 0.0, %v741
    %743 = vmatmul.f32.gmra.mxu0 %v325
    %v744 = vpop.f32.mrf.mxu0
    %v745 = vadd.f32 0.0, %v744
    %746 = vdwg.mxu0
    %747 = vmatpush.msra.mxu0 %v459
    %748 = vmatpush.msra.mxu0 %v458
    %749 = vmatpush.msra.mxu0 %v457
    %750 = vmatpush.msra.mxu0 %v456
    %751 = vmatpush.msra.mxu0 %v455
    %752 = vmatpush.msra.mxu0 %v454
    %753 = vmatpush.msra.mxu0 %v453
    %754 = vmatpush.msra.mxu0 %v452
    %755 = vmatpush.msra.mxu0 %v451
    %756 = vmatpush.msra.mxu0 %v450
    %757 = vmatpush.msra.mxu0 %v449
    %758 = vmatpush.msra.mxu0 %v448
    %759 = vmatpush.msra.mxu0 %v447
    %760 = vmatpush.msra.mxu0 %v446
    %761 = vmatpush.msra.mxu0 %v445
    %762 = vmatpush.msra.mxu0 %v444
    %763 = vmatmul.f32.gmra.mxu0 %v181
    %v764 = vpop.f32.mrf.mxu0
    %v765 = vadd.f32 0.0, %v764
    %766 = vmatmul.f32.gmra.mxu0 %v183
    %v767 = vpop.f32.mrf.mxu0
    %v768 = vadd.f32 0.0, %v767
    %769 = vmatmul.f32.gmra.mxu0 %v230
    %v770 = vpop.f32.mrf.mxu0
    %v771 = vadd.f32 0.0, %v770
    %772 = vmatmul.f32.gmra.mxu0 %v232
    %v773 = vpop.f32.mrf.mxu0
    %v774 = vadd.f32 0.0, %v773
    %775 = vmatmul.f32.gmra.mxu0 %v279
    %v776 = vpop.f32.mrf.mxu0
    %v777 = vadd.f32 0.0, %v776
    %778 = vmatmul.f32.gmra.mxu0 %v281
    %v779 = vpop.f32.mrf.mxu0
    %v780 = vadd.f32 0.0, %v779
    %781 = vmatmul.f32.gmra.mxu0 %v328
    %v782 = vpop.f32.mrf.mxu0
    %v783 = vadd.f32 0.0, %v782
    %784 = vmatmul.f32.gmra.mxu0 %v330
    %v785 = vpop.f32.mrf.mxu0
    %v786 = vadd.f32 0.0, %v785
    %787 = vdwg.mxu0
    %v788 = vmax.f32 %v478, %v484
    %v789 = vmax.f32 %v788, %v490
    %v790 = vmax.f32 %v789, %v496
    %v791 = vmax.f32 %v481, %v487
    %v792 = vmax.f32 %v791, %v493
    %v793 = vmax.f32 %v792, %v499
    %v794 = vmax.f32 %v519, %v525
    %v795 = vmax.f32 %v794, %v531
    %v796 = vmax.f32 %v795, %v537
    %v797 = vmax.f32 %v522, %v528
    %v798 = vmax.f32 %v797, %v534
    %v799 = vmax.f32 %v798, %v540
    %v800 = vmax.f32 %v560, %v566
    %v801 = vmax.f32 %v800, %v572
    %v802 = vmax.f32 %v801, %v578
    %v803 = vmax.f32 %v563, %v569
    %v804 = vmax.f32 %v803, %v575
    %v805 = vmax.f32 %v804, %v581
    %v806 = vmax.f32 %v601, %v607
    %v807 = vmax.f32 %v806, %v613
    %v808 = vmax.f32 %v807, %v619
    %v809 = vmax.f32 %v604, %v610
    %v810 = vmax.f32 %v809, %v616
    %v811 = vmax.f32 %v810, %v622
    %v812 = vmax.f32 %v642, %v648
    %v813 = vmax.f32 %v812, %v654
    %v814 = vmax.f32 %v813, %v660
    %v815 = vmax.f32 %v645, %v651
    %v816 = vmax.f32 %v815, %v657
    %v817 = vmax.f32 %v816, %v663
    %v818 = vmax.f32 %v683, %v689
    %v819 = vmax.f32 %v818, %v695
    %v820 = vmax.f32 %v819, %v701
    %v821 = vmax.f32 %v686, %v692
    %v822 = vmax.f32 %v821, %v698
    %v823 = vmax.f32 %v822, %v704
    %v824 = vmax.f32 %v724, %v730
    %v825 = vmax.f32 %v824, %v736
    %v826 = vmax.f32 %v825, %v742
    %v827 = vmax.f32 %v727, %v733
    %v828 = vmax.f32 %v827, %v739
    %v829 = vmax.f32 %v828, %v745
    %v830 = vmax.f32 %v765, %v771
    %v831 = vmax.f32 %v830, %v777
    %v832 = vmax.f32 %v831, %v783
    %v833 = vmax.f32 %v768, %v774
    %v834 = vmax.f32 %v833, %v780
    %v835 = vmax.f32 %v834, %v786
    %v836 = vmax.f32 %v790, %v793
    %v837 = vmax.f32 %v796, %v799
    %v838 = vmax.f32 %v802, %v805
    %v839 = vmax.f32 %v808, %v811
    %v840 = vmax.f32 %v814, %v817
    %v841 = vmax.f32 %v820, %v823
    %v842 = vmax.f32 %v826, %v829
    %v843 = vmax.f32 %v832, %v835
    %p844 = scmp.eq.s32.totalorder 0, 0
    // Predicated region
    $region18: #{tpu_custom_call.1} parent=1 // pred_check
      %p845 = pneg %p844
    $region19: #{tpu_custom_call.1} parent=1 // pred_check_branch
      %847 = sbr.rel (%p845) target = $region21
    $region20: #{tpu_custom_call.1} parent=1 // pred_region
      %848 = vst [vmem:[%s3] sm:$0x7f] %v836
      %849 = vst [vmem:[%s3 + $0x8] sm:$0x7f] %v837
      %850 = vst [vmem:[%s3 + $0x10] sm:$0x7f] %v838
      %851 = vst [vmem:[%s3 + $0x18] sm:$0x7f] %v839
      %852 = vst [vmem:[%s3 + $0x20] sm:$0x7f] %v840
      %853 = vst [vmem:[%s3 + $0x28] sm:$0x7f] %v841
      %854 = vst [vmem:[%s3 + $0x30] sm:$0x7f] %v842
      %855 = vst [vmem:[%s3 + $0x38] sm:$0x7f] %v843
    $region21: #{tpu_custom_call.1} parent=1 // pred_fallthru
      _
    %p856 = scmp.gt.s32.totalorder 0, 0
    // Predicated region
    $region22: #{tpu_custom_call.1} parent=1 // pred_check
      %p857 = pneg %p856
    $region23: #{tpu_custom_call.1} parent=1 // pred_check_branch
      %859 = sbr.rel (%p857) target = $region25
    $region24: #{tpu_custom_call.1} parent=1 // pred_region
      %v860 = vld [vmem:[%s3] sm:$0x7f]
      %v861 = vld [vmem:[%s3 + $0x8] sm:$0x7f]
      %v862 = vld [vmem:[%s3 + $0x10] sm:$0x7f]
      %v863 = vld [vmem:[%s3 + $0x18] sm:$0x7f]
      %v864 = vld [vmem:[%s3 + $0x20] sm:$0x7f]
      %v865 = vld [vmem:[%s3 + $0x28] sm:$0x7f]
      %v866 = vld [vmem:[%s3 + $0x30] sm:$0x7f]
      %v867 = vld [vmem:[%s3 + $0x38] sm:$0x7f]
      %v868 = vmax.f32 %v860, %v836
      %v869 = vmax.f32 %v861, %v837
      %v870 = vmax.f32 %v862, %v838
      %v871 = vmax.f32 %v863, %v839
      %v872 = vmax.f32 %v864, %v840
      %v873 = vmax.f32 %v865, %v841
      %v874 = vmax.f32 %v866, %v842
      %v875 = vmax.f32 %v867, %v843
      %876 = vst [vmem:[%s3] sm:$0x7f] %v868
      %877 = vst [vmem:[%s3 + $0x8] sm:$0x7f] %v869
      %878 = vst [vmem:[%s3 + $0x10] sm:$0x7f] %v870
      %879 = vst [vmem:[%s3 + $0x18] sm:$0x7f] %v871
      %880 = vst [vmem:[%s3 + $0x20] sm:$0x7f] %v872
      %881 = vst [vmem:[%s3 + $0x28] sm:$0x7f] %v873
      %882 = vst [vmem:[%s3 + $0x30] sm:$0x7f] %v874
      %883 = vst [vmem:[%s3 + $0x38] sm:$0x7f] %v875
    $region25: #{tpu_custom_call.1} parent=1 // pred_fallthru
      _
    // Predicated region
    $region26: #{tpu_custom_call.1} parent=1 // pred_check
      _
    $region27: #{tpu_custom_call.1} parent=1 // pred_check_branch
      %885 = sbr.rel (0) target = $region29
    $region28: #{tpu_custom_call.1} parent=1 // pred_region
      _
    $region29: #{tpu_custom_call.1} parent=1 // pred_fallthru
      _
    // Predicated region
    $region30: #{tpu_custom_call.1} parent=1 // pred_check
      _
    $region31: #{tpu_custom_call.1} parent=1 // pred_check_branch
      %887 = sbr.rel (0) target = $region33
    $region32: #{tpu_custom_call.1} parent=1 // pred_region
      _
    $region33: #{tpu_custom_call.1} parent=1 // pred_fallthru
      _
    %888 = vsyncpa [#allocation3], 1

</llo_original>
